<compile_context>
chip_gen: v6e
topology: v6e:2x2x1
jax: 0.10.0
libtpu: 0.0.40
codegen_flags: <defaults>
</compile_context>

<pallas_src>
import functools

import jax
import jax.numpy as jnp
from jax import lax
from jax.experimental import pallas as pl
from jax.experimental.pallas import tpu as pltpu


def _kldiv_kernel(logits_ref, targets_ref, o_ref, *, inv_T, TB, B, mask_rows):
    # (TB, C) tile in VMEM; all math in f32 regardless of input dtype (bf16 ok).
    x = logits_ref[...].astype(jnp.float32)
    y = targets_ref[...].astype(jnp.float32)
    if inv_T != 1.0:  # constant multiply instead of per-element divide by T
        x = x * inv_T
        y = y * inv_T

    if mask_rows:
        # Last tile may hang off the end of the batch: neutralize padded rows
        # before any transcendental (garbage could be inf/nan) and zero their
        # contribution afterwards.
        row0 = pl.program_id(0) * TB
        rows = row0 + lax.broadcasted_iota(jnp.int32, x.shape, 0)
        valid = rows < B
        x = jnp.where(valid, x, 0.0)
        y = jnp.where(valid, y, 0.0)

    # q = log_softmax(logits / T, axis=1)
    x_max = jnp.max(x, axis=1, keepdims=True)
    lse_x = jnp.log(jnp.sum(jnp.exp(x - x_max), axis=1, keepdims=True)) + x_max
    q = x - lse_x

    # p = softmax(targets / T, axis=1), log_p shares the same exp (no third exp)
    y_max = jnp.max(y, axis=1, keepdims=True)
    y_shift = y - y_max
    e_y = jnp.exp(y_shift)
    s_y = jnp.sum(e_y, axis=1, keepdims=True)
    p = e_y * pl.reciprocal(s_y, approx=False)  # one reciprocal per row
    log_p = y_shift - jnp.log(s_y)

    # F.kl_div(q, p, reduction='sum') contribution of this tile
    kl = p * (log_p - q)
    if mask_rows:
        kl = jnp.where(valid, kl, 0.0)
    partial = jnp.sum(kl)

    # Lane-dense (8,128) output block; partial sum at [0,0], zeros elsewhere.
    sub = lax.broadcasted_iota(jnp.int32, o_ref.shape, 0)
    lane = lax.broadcasted_iota(jnp.int32, o_ref.shape, 1)
    o_ref[...] = jnp.where((sub == 0) & (lane == 0), partial, 0.0)


def kldiv_pallas(logits, targets, T=1.0, reduction="batchmean", block_rows=None):
    assert reduction == "batchmean", "only 'batchmean' reduction implemented"
    assert logits.shape == targets.shape and logits.ndim == 2
    B, C = logits.shape
    in_bytes = jnp.dtype(logits.dtype).itemsize

    if block_rows is None:
        # 2 inputs x 2 pipeline buffers x (TB, C) tiles: keep under ~8 MiB so the
        # pipeline fits the default scoped VMEM on every generation
        # (v5e 16 MiB scoped, v6e 32 MiB, v7x 32 MiB scoped / 64 MiB physical).
        budget = 8 * 1024 * 1024
        tb = budget // (4 * C * in_bytes)
        tb = max(8, (tb // 8) * 8)
    else:
        tb = block_rows
    TB = B if B <= tb else tb                 # full dim or a multiple of 8
    num_tiles = pl.cdiv(B, TB)
    mask_rows = (B % TB) != 0

    kernel = functools.partial(
        _kldiv_kernel, inv_T=float(1.0 / T), TB=TB, B=B, mask_rows=mask_rows)

    cost = pl.CostEstimate(
        flops=10 * B * C,
        transcendentals=3 * B * C,
        bytes_accessed=2 * B * C * in_bytes + num_tiles * 8 * 128 * 4)

    partials = pl.pallas_call(
        kernel,
        out_shape=jax.ShapeDtypeStruct((num_tiles * 8, 128), jnp.float32),
        grid=(num_tiles,),
        in_specs=[
            pl.BlockSpec((TB, C), lambda i: (i, 0)),
            pl.BlockSpec((TB, C), lambda i: (i, 0)),
        ],
        out_specs=pl.BlockSpec((8, 128), lambda i: (i, 0)),
        compiler_params=pltpu.CompilerParams(
            dimension_semantics=("parallel",),
            vmem_limit_bytes=32 * 1024 * 1024),
        cost_estimate=cost,
    )(logits, targets)

    # Tiny final reduction + batchmean / temperature scaling in plain JAX.
    return jnp.sum(partials) / B * (T * T)


def _kldiv_ref(logits, targets, T=1.0):
    x = logits.astype(jnp.float32)
    y = targets.astype(jnp.float32)
    q = jax.nn.log_softmax(x / T, axis=1)
    log_p = jax.nn.log_softmax(y / T, axis=1)
    p = jnp.exp(log_p)
    return jnp.sum(p * (log_p - q)) / logits.shape[0] * (T * T)


if __name__ == "__main__":
    key = jax.random.PRNGKey(0)
    k1, k2, k3, k4 = jax.random.split(key, 4)

    # Small shapes consistent with the module: logits/targets are [batch, classes].
    B, C = 8, 32
    logits = jax.random.normal(k1, (B, C), dtype=jnp.float32)
    targets = jax.random.normal(k2, (B, C), dtype=jnp.float32)

    out = jax.block_until_ready(kldiv_pallas(logits, targets, T=1.0))
    ref = _kldiv_ref(logits, targets, T=1.0)
    assert jnp.allclose(out, ref, atol=1e-5, rtol=1e-4), (out, ref)

    # Ragged batch tiling + temperature != 1 (exercises row mask and T^2 scaling).
    B2, C2 = 20, 32
    logits2 = jax.random.normal(k3, (B2, C2), dtype=jnp.float32)
    targets2 = jax.random.normal(k4, (B2, C2), dtype=jnp.float32)
    out2 = jax.block_until_ready(kldiv_pallas(logits2, targets2, T=4.0, block_rows=8))
    ref2 = _kldiv_ref(logits2, targets2, T=4.0)
    assert jnp.allclose(out2, ref2, atol=1e-5, rtol=1e-4), (out2, ref2)

    # bf16 inputs halve HBM traffic; math stays f32 inside the kernel.
    out3 = jax.block_until_ready(
        kldiv_pallas(logits.astype(jnp.bfloat16), targets.astype(jnp.bfloat16)))
    ref3 = _kldiv_ref(logits.astype(jnp.bfloat16), targets.astype(jnp.bfloat16))
    assert jnp.allclose(out3, ref3, atol=1e-3, rtol=1e-3), (out3, ref3)

    print("KERNEL_OK")
</pallas_src>

<mosaic_0001>
module attributes {stable_mosaic.version = 11 : i64} {
  func.func @_kldiv_kernel(%arg0: i32, %arg1: memref<8x32xf32, #tpu.memory_space<vmem>>, %arg2: memref<8x32xf32, #tpu.memory_space<vmem>>, %arg3: memref<8x128xf32, #tpu.memory_space<vmem>>) attributes {dimension_semantics = [#tpu.dimension_semantics<parallel>], iteration_bounds = array<i64: 1>, scalar_prefetch = 0 : i64, scratch_operands = 0 : i64, tpu.core_type = #tpu.core_type<tc>, window_params = [{transform_indices = @transform_0, window_bounds = array<i64: 8, 32>}, {transform_indices = @transform_1, window_bounds = array<i64: 8, 32>}, {transform_indices = @transform_2, window_bounds = array<i64: 8, 128>}]} {
    %c0 = arith.constant 0 : index
    %c0_0 = arith.constant 0 : index
    %0 = vector.load %arg1[%c0, %c0_0] : memref<8x32xf32, #tpu.memory_space<vmem>>, vector<8x32xf32>
    %c0_1 = arith.constant 0 : index
    %c0_2 = arith.constant 0 : index
    %1 = vector.load %arg2[%c0_1, %c0_2] : memref<8x32xf32, #tpu.memory_space<vmem>>, vector<8x32xf32>
    %cst = arith.constant dense<0xFF800000> : vector<8xf32>
    %2 = vector.multi_reduction <maximumf>, %0, %cst [1] : vector<8x32xf32> to vector<8xf32>
    %3 = vector.shape_cast %2 : vector<8xf32> to vector<8x1xf32>
    %4 = vector.broadcast %3 : vector<8x1xf32> to vector<8x32xf32>
    %5 = arith.subf %0, %4 : vector<8x32xf32>
    %6 = math.exp %5 : vector<8x32xf32>
    %cst_3 = arith.constant dense<0.000000e+00> : vector<8xf32>
    %7 = vector.multi_reduction <add>, %6, %cst_3 [1] : vector<8x32xf32> to vector<8xf32>
    %8 = vector.shape_cast %7 : vector<8xf32> to vector<8x1xf32>
    %9 = math.log %8 : vector<8x1xf32>
    %10 = arith.addf %9, %3 : vector<8x1xf32>
    %11 = vector.broadcast %10 : vector<8x1xf32> to vector<8x32xf32>
    %12 = arith.subf %0, %11 : vector<8x32xf32>
    %cst_4 = arith.constant dense<0xFF800000> : vector<8xf32>
    %13 = vector.multi_reduction <maximumf>, %1, %cst_4 [1] : vector<8x32xf32> to vector<8xf32>
    %14 = vector.shape_cast %13 : vector<8xf32> to vector<8x1xf32>
    %15 = vector.broadcast %14 : vector<8x1xf32> to vector<8x32xf32>
    %16 = arith.subf %1, %15 : vector<8x32xf32>
    %17 = math.exp %16 : vector<8x32xf32>
    %cst_5 = arith.constant dense<0.000000e+00> : vector<8xf32>
    %18 = vector.multi_reduction <add>, %17, %cst_5 [1] : vector<8x32xf32> to vector<8xf32>
    %19 = vector.shape_cast %18 : vector<8xf32> to vector<8x1xf32>
    %20 = tpu.reciprocal %19 : vector<8x1xf32> -> vector<8x1xf32>
    %21 = vector.broadcast %20 : vector<8x1xf32> to vector<8x32xf32>
    %22 = arith.mulf %17, %21 : vector<8x32xf32>
    %23 = math.log %19 : vector<8x1xf32>
    %24 = vector.broadcast %23 : vector<8x1xf32> to vector<8x32xf32>
    %25 = arith.subf %16, %24 : vector<8x32xf32>
    %26 = arith.subf %25, %12 : vector<8x32xf32>
    %27 = arith.mulf %22, %26 : vector<8x32xf32>
    %28 = vector.shape_cast %27 : vector<8x32xf32> to vector<1x8x32xf32>
    %cst_6 = arith.constant dense<0.000000e+00> : vector<1xf32>
    %29 = vector.multi_reduction <add>, %28, %cst_6 [1, 2] : vector<1x8x32xf32> to vector<1xf32>
    %30 = vector.shape_cast %29 : vector<1xf32> to vector<1x1x1xf32>
    %31 = vector.extract %30[0, 0, 0] : f32 from vector<1x1x1xf32>
    %32 = tpu.iota {dimensions = array<i32: 0>} : vector<8x128xi32>
    %33 = tpu.iota {dimensions = array<i32: 1>} : vector<8x128xi32>
    %c0_i32 = arith.constant 0 : i32
    %34 = vector.broadcast %c0_i32 : i32 to vector<8x128xi32>
    %35 = arith.cmpi eq, %32, %34 : vector<8x128xi32>
    %c0_i32_7 = arith.constant 0 : i32
    %36 = vector.broadcast %c0_i32_7 : i32 to vector<8x128xi32>
    %37 = arith.cmpi eq, %33, %36 : vector<8x128xi32>
    %38 = arith.andi %35, %37 : vector<8x128xi1>
    %cst_8 = arith.constant 0.000000e+00 : f32
    %39 = vector.broadcast %31 : f32 to vector<8x128xf32>
    %40 = vector.broadcast %cst_8 : f32 to vector<8x128xf32>
    %41 = arith.select %38, %39, %40 : vector<8x128xi1>, vector<8x128xf32>
    %c0_9 = arith.constant 0 : index
    %c0_10 = arith.constant 0 : index
    %42 = vector.load %arg3[%c0_9, %c0_10] : memref<8x128xf32, #tpu.memory_space<vmem>>, vector<8x128xf32>
    tpu.vector_store %arg3[%c0_9, %c0_10], %41 {strides = array<i32>} : memref<8x128xf32, #tpu.memory_space<vmem>>, vector<8x128xf32>,
    return
  }
  func.func @transform_0(%arg0: i32) -> (i32, i32) {
    %c0_i32 = arith.constant 0 : i32
    %c0_i32_0 = arith.constant 0 : i32
    return %arg0, %c0_i32 : i32, i32
  }
  func.func @transform_1(%arg0: i32) -> (i32, i32) {
    %c0_i32 = arith.constant 0 : i32
    %c0_i32_0 = arith.constant 0 : i32
    return %arg0, %c0_i32 : i32, i32
  }
  func.func @transform_2(%arg0: i32) -> (i32, i32) {
    %c0_i32 = arith.constant 0 : i32
    %c0_i32_0 = arith.constant 0 : i32
    return %arg0, %c0_i32 : i32, i32
  }
}

</mosaic_0001>

<llo_original>
// kernel: tpu_custom_call.1
$region0: #{tpu_custom_call.1}
  #allocation0 [shape = 'u32[]', space=smem, size = 0x4, offset = 0x4, fixed_abs, tag = 'smem constant byte address 0x4 - core index']
  #allocation1 [shape = 'u32[144,128]{1,0:T(1,128)}', space=vmem, size = 0x12000, scoped, tag = 'internal scratch']
  %s0 = inlined_call_operand.hbm [shape: f32[8,32], index: 0, kind: input, shape index: {}]
  %s1 = inlined_call_operand.hbm [shape: f32[8,32], index: 1, kind: input, shape index: {}]
  %s2 = inlined_call_operand.hbm [shape: f32[8,128], index: 2, kind: output, shape index: {}]
  %s3 = sld [smem:[#allocation0]]
  $region26: #{tpu_custom_call.1} parent=0
    _
  %s5 = ssub.s32 1, %s3
  %s6 = scalar_select 0, %s5, %s3
  $region1: #{tpu_custom_call.1} parent=0
    #allocation2 [shape = 'u8[4096]{0}', space=vmem, size = 0x1000, scoped, tag = 'input window, operand 0, single buffered']
    #allocation3 [shape = 's32[1]{0}', space=sflag, size = 0x4, scoped, tag = 'scoped memory for tpu_custom_call.1']
    #allocation4 [shape = 's32[1]{0}', space=sflag, size = 0x4, scoped, tag = 'scoped memory for tpu_custom_call.1']
    #allocation5 [shape = 'u8[4096]{0}', space=vmem, size = 0x1000, scoped, tag = 'input window, operand 1, single buffered']
    #allocation6 [shape = 's32[1]{0}', space=sflag, size = 0x4, scoped, tag = 'scoped memory for tpu_custom_call.1']
    #allocation7 [shape = 'u8[4096]{0}', space=vmem, size = 0x1000, scoped, tag = 'output window, operand 0, single buffered']
    %7 = vsyncpa [#allocation3], 0
    %8 = vsyncpa [#allocation6], 0
    %9 = vsyncpa [#allocation4], 0
    // Predicated region
    $region2: #{tpu_custom_call.1} parent=1 // pred_check
      _
    $region3: #{tpu_custom_call.1} parent=1 // pred_check_branch
      %11 = sbr.rel (0) target = $region5
    $region4: #{tpu_custom_call.1} parent=1 // pred_region
      %s13 = ssub.s32 128, 128
      %14 = vsyncadd [#allocation3], %s13
      %s16 = sshll.u32 [#allocation2], 4
      %s17 = int_to_ptr.vmem [resolvable:$true] %s16
      %19 = dma.hbm_to_vmem [thread:$0]  %s0, 128, %s17, [#allocation3]
    $region5: #{tpu_custom_call.1} parent=1 // pred_fallthru
      _
    // Predicated region
    $region6: #{tpu_custom_call.1} parent=1 // pred_check
      _
    $region7: #{tpu_custom_call.1} parent=1 // pred_check_branch
      %21 = sbr.rel (0) target = $region9
    $region8: #{tpu_custom_call.1} parent=1 // pred_region
      %s23 = ssub.s32 128, 128
      %24 = vsyncadd [#allocation6], %s23
      %s26 = sshll.u32 [#allocation5], 4
      %s27 = int_to_ptr.vmem [resolvable:$true] %s26
      %29 = dma.hbm_to_vmem [thread:$0]  %s1, 128, %s27, [#allocation6]
    $region9: #{tpu_custom_call.1} parent=1 // pred_fallthru
      _
    // Predicated region
    $region10: #{tpu_custom_call.1} parent=1 // pred_check
      _
    $region11: #{tpu_custom_call.1} parent=1 // pred_check_branch
      %31 = sbr.rel (0) target = $region13
    $region12: #{tpu_custom_call.1} parent=1 // pred_region
      %32 = dma.done [#allocation3], 128
    $region13: #{tpu_custom_call.1} parent=1 // pred_fallthru
      _
    // Predicated region
    $region14: #{tpu_custom_call.1} parent=1 // pred_check
      _
    $region15: #{tpu_custom_call.1} parent=1 // pred_check_branch
      %34 = sbr.rel (0) target = $region17
    $region16: #{tpu_custom_call.1} parent=1 // pred_region
      %35 = dma.done [#allocation6], 128
    $region17: #{tpu_custom_call.1} parent=1 // pred_fallthru
      _
    %v36 = vld [vmem:[#allocation2] sm:$0xff]
    %v37 = vld [vmem:[#allocation5] sm:$0xff]
    %vm38 = vcmask 261120
    %v39 = vsel %vm38, %v36, -inf
    %40 = vmax.xlane.f32.xlu0 %v39
    %v41 = vpop.xlane.xlu0 %40
    %v42 = vsub.f32 %v36, %v41
    %v43 = vmul.f32 %v42, 1.442695
    %v44 = vpow.pop %v43
    %v45 = vsel %vm38, %v44, 0.0
    %46 = vadd.xlane.f32.xlu0 %v45
    %v47 = vpop.xlane.xlu0 %46
    %v48 = vlog2.pop %v47
    %v49 = vmul.f32 %v48, 0.6931472
    %v50 = vadd.f32 %v49, %v41
    %v51 = vsub.f32 %v36, %v50
    %v52 = vsel %vm38, %v37, -inf
    %53 = vmax.xlane.f32.xlu0 %v52
    %v54 = vpop.xlane.xlu0 %53
    %v55 = vsub.f32 %v37, %v54
    %v56 = vmul.f32 %v55, 1.442695
    %v57 = vpow.pop %v56
    %v58 = vsel %vm38, %v57, 0.0
    %59 = vadd.xlane.f32.xlu0 %v58
    %v60 = vpop.xlane.xlu0 %59
    %v61 = vrcp.pop %v60
    %v62 = vmul.f32 %v57, %v61
    %v63 = vlog2.pop %v60
    %v64 = vmul.f32 %v63, 0.6931472
    %v65 = vsub.f32 %v55, %v64
    %v66 = vsub.f32 %v65, %v51
    %v67 = vmul.f32 %v62, %v66
    %v68 = vsel %vm38, %v67, 0.0
    %69 = vadd.xlane.f32.xlu0 %v68
    %v70 = vpop.xlane.xlu0 %69
    %v71 = vrot.slane %v70, 4
    %v72 = vadd.f32 %v70, %v71
    %v73 = vrot.slane %v72, 2
    %v74 = vadd.f32 %v72, %v73
    %v75 = vrot.slane %v74, 1
    %v76 = vadd.f32 %v74, %v75
    %s77 = vtos %v76
    %v78 = vlaneseq
    %v79 = vshrl.u32 %v78, 7
    %v80 = vlaneseq
    %v81 = vand.u32 %v80, 127
    %vm82 = vcmp.eq.s32.totalorder %v79, 0
    %vm83 = vcmp.eq.s32.totalorder %v81, 0
    %vm84 = vmand %vm82, %vm83
    %v85 = vstv %s77
    %v86 = vsel %vm84, %v85, 0.0
    %87 = vst [vmem:[#allocation7] sm:$0xff] %v86
    // Predicated region
    $region18: #{tpu_custom_call.1} parent=1 // pred_check
      _
    $region19: #{tpu_custom_call.1} parent=1 // pred_check_branch
      %89 = sbr.rel (0) target = $region21
    $region20: #{tpu_custom_call.1} parent=1 // pred_region
      %s91 = ssub.s32 128, 128
      %92 = vsyncadd [#allocation4], %s91
      %s94 = sshll.u32 [#allocation7], 4
      %s95 = int_to_ptr.vmem [resolvable:$true] %s94
      %97 = dma.vmem_to_hbm [thread:$0]  %s95, 128, %s2, [#allocation4]
    $region21: #{tpu_custom_call.1} parent=1 // pred_fallthru
      _
    // Predicated region
    $region22: #{tpu_custom_call.1} parent=1 // pred_check
      _
    $region23: #{tpu_custom_call.1} parent=1 // pred_check_branch
      %99 = sbr.rel (0) target = $region25
    $region24: #{tpu_custom_call.1} parent=1 // pred_region
      %100 = dma.done [#allocation4], 128
    $region25: #{tpu_custom_call.1} parent=1 // pred_fallthru
      _
    %101 = vsyncpa [#allocation3], 1
    %102 = vsyncpa [#allocation6], 1
    %103 = vsyncpa [#allocation4], 1

</llo_original>
